<compile_context>
chip_gen: v7x
topology: tpu7x:2x2x1
jax: 0.10.0
libtpu: 0.0.40
codegen_flags: <defaults>
</compile_context>

<pallas_src>
import jax
import jax.numpy as jnp
from jax.experimental import pallas as pl
from jax.experimental.pallas import tpu as pltpu


def _ce_onehot_kernel(preds_ref, labels_ref, loss_ref):
    """Per batch tile: write per-row loss (tile_b, 1) = sum(lab)*(m+lse) - sum(lab*x)."""
    x = preds_ref[...].astype(jnp.float32)      # (TB, C)
    lab = labels_ref[...].astype(jnp.float32)   # (TB, C)

    # numerically-stable logsumexp along the class/lane axis (all reductions stay 2-D)
    m = jnp.max(x, axis=-1, keepdims=True)                              # (TB, 1)
    lse = jnp.log(jnp.sum(jnp.exp(x - m), axis=-1, keepdims=True))      # (TB, 1)

    lab_sum = jnp.sum(lab, axis=-1, keepdims=True)                      # (TB, 1)
    lab_dot = jnp.sum(lab * x, axis=-1, keepdims=True)                  # (TB, 1)

    # -sum(lab * (x - m - lse)) == sum(lab)*(m+lse) - sum(lab*x)   (exact, any labels)
    loss_ref[...] = (lab_sum * (m + lse) - lab_dot).astype(loss_ref.dtype)


def _pick_tile_b(B, C, itemsize, vmem_input_budget=32 * 1024 * 1024):
    """Largest batch tile whose double-buffered (2 inputs x 2 buffers) footprint fits
    the VMEM input budget; multiple of 8, capped, never beyond the (padded) batch."""
    tile_b = vmem_input_budget // (4 * C * itemsize)
    tile_b = max(8, (tile_b // 8) * 8)
    tile_b = min(tile_b, 2048)                      # bound per-step latency
    b_pad = ((B + 7) // 8) * 8
    tile_b = min(tile_b, b_pad)
    return max(tile_b, 8)


def cross_entropy_loss_one_hot(preds, labels, *, tile_b=None,
                               vmem_limit_bytes=48 * 1024 * 1024):
    """preds, labels: (B, C) float arrays (f32 or bf16). Returns scalar f32 loss."""
    B, C = preds.shape
    assert labels.shape == (B, C)

    itemsize = max(jnp.dtype(preds.dtype).itemsize, jnp.dtype(labels.dtype).itemsize)
    if tile_b is None:
        tile_b = _pick_tile_b(B, C, itemsize)

    grid = (pl.cdiv(B, tile_b),)

    per_row = pl.pallas_call(
        _ce_onehot_kernel,
        out_shape=jax.ShapeDtypeStruct((B, 1), jnp.float32),
        grid_spec=pltpu.PrefetchScalarGridSpec(
            num_scalar_prefetch=0,
            grid=grid,
            in_specs=[
                pl.BlockSpec((tile_b, C), lambda i: (i, 0)),
                pl.BlockSpec((tile_b, C), lambda i: (i, 0)),
            ],
            out_specs=pl.BlockSpec((tile_b, 1), lambda i: (i, 0)),
        ),
        compiler_params=pltpu.CompilerParams(
            dimension_semantics=("parallel",),      # independent per-tile outputs
            vmem_limit_bytes=vmem_limit_bytes,
        ),
    )(preds, labels)

    # Tiny final reduction in plain JAX (mean over the batch).
    return jnp.mean(per_row[:, 0])


def _reference(preds, labels):
    return jnp.mean(jnp.sum(-labels * jax.nn.log_softmax(preds, axis=-1), axis=-1))


if __name__ == "__main__":
    key = jax.random.PRNGKey(0)
    k1, k2, k3, k4 = jax.random.split(key, 4)

    # Case 1: small one-hot labels, f32, divisible batch.
    B, C = 16, 32
    preds = jax.random.normal(k1, (B, C), dtype=jnp.float32)
    classes = jax.random.randint(k2, (B,), 0, C)
    labels = jax.nn.one_hot(classes, C, dtype=jnp.float32)

    loss = jax.block_until_ready(cross_entropy_loss_one_hot(preds, labels))
    ref = _reference(preds, labels)
    assert jnp.allclose(loss, ref, rtol=1e-5, atol=1e-5), (loss, ref)

    # Case 2: ragged batch (B not a multiple of tile_b) with soft labels.
    B2, C2 = 13, 32
    preds2 = jax.random.normal(k3, (B2, C2), dtype=jnp.float32)
    labels2 = jax.nn.softmax(jax.random.normal(k4, (B2, C2), dtype=jnp.float32), axis=-1)

    loss2 = jax.block_until_ready(cross_entropy_loss_one_hot(preds2, labels2))
    ref2 = _reference(preds2, labels2)
    assert jnp.allclose(loss2, ref2, rtol=1e-5, atol=1e-5), (loss2, ref2)

    print("KERNEL_OK")
</pallas_src>

<mosaic_0001>
module attributes {stable_mosaic.version = 11 : i64} {
  func.func @_ce_onehot_kernel(%arg0: i32, %arg1: memref<16x32xf32, #tpu.memory_space<vmem>>, %arg2: memref<16x32xf32, #tpu.memory_space<vmem>>, %arg3: memref<16x1xf32, #tpu.memory_space<vmem>>) attributes {dimension_semantics = [#tpu.dimension_semantics<parallel>], iteration_bounds = array<i64: 1>, scalar_prefetch = 0 : i64, scratch_operands = 0 : i64, tpu.core_type = #tpu.core_type<tc>, window_params = [{transform_indices = @transform_0, window_bounds = array<i64: 16, 32>}, {transform_indices = @transform_1, window_bounds = array<i64: 16, 32>}, {transform_indices = @transform_2, window_bounds = array<i64: 16, 1>}]} {
    %c0 = arith.constant 0 : index
    %c0_0 = arith.constant 0 : index
    %0 = vector.load %arg1[%c0, %c0_0] : memref<16x32xf32, #tpu.memory_space<vmem>>, vector<16x32xf32>
    %c0_1 = arith.constant 0 : index
    %c0_2 = arith.constant 0 : index
    %1 = vector.load %arg2[%c0_1, %c0_2] : memref<16x32xf32, #tpu.memory_space<vmem>>, vector<16x32xf32>
    %cst = arith.constant dense<0xFF800000> : vector<16xf32>
    %2 = vector.multi_reduction <maximumf>, %0, %cst [1] : vector<16x32xf32> to vector<16xf32>
    %3 = vector.shape_cast %2 : vector<16xf32> to vector<16x1xf32>
    %4 = vector.broadcast %3 : vector<16x1xf32> to vector<16x32xf32>
    %5 = arith.subf %0, %4 : vector<16x32xf32>
    %6 = math.exp %5 : vector<16x32xf32>
    %cst_3 = arith.constant dense<0.000000e+00> : vector<16xf32>
    %7 = vector.multi_reduction <add>, %6, %cst_3 [1] : vector<16x32xf32> to vector<16xf32>
    %8 = vector.shape_cast %7 : vector<16xf32> to vector<16x1xf32>
    %9 = math.log %8 : vector<16x1xf32>
    %cst_4 = arith.constant dense<0.000000e+00> : vector<16xf32>
    %10 = vector.multi_reduction <add>, %1, %cst_4 [1] : vector<16x32xf32> to vector<16xf32>
    %11 = vector.shape_cast %10 : vector<16xf32> to vector<16x1xf32>
    %12 = arith.mulf %1, %0 : vector<16x32xf32>
    %cst_5 = arith.constant dense<0.000000e+00> : vector<16xf32>
    %13 = vector.multi_reduction <add>, %12, %cst_5 [1] : vector<16x32xf32> to vector<16xf32>
    %14 = vector.shape_cast %13 : vector<16xf32> to vector<16x1xf32>
    %15 = arith.addf %3, %9 : vector<16x1xf32>
    %16 = arith.mulf %11, %15 : vector<16x1xf32>
    %17 = arith.subf %16, %14 : vector<16x1xf32>
    %c0_6 = arith.constant 0 : index
    %c0_7 = arith.constant 0 : index
    %18 = vector.load %arg3[%c0_6, %c0_7] : memref<16x1xf32, #tpu.memory_space<vmem>>, vector<16x1xf32>
    tpu.vector_store %arg3[%c0_6, %c0_7], %17 {strides = array<i32>} : memref<16x1xf32, #tpu.memory_space<vmem>>, vector<16x1xf32>,
    return
  }
  func.func @transform_0(%arg0: i32) -> (i32, i32) {
    %c0_i32 = arith.constant 0 : i32
    %c0_i32_0 = arith.constant 0 : i32
    return %arg0, %c0_i32 : i32, i32
  }
  func.func @transform_1(%arg0: i32) -> (i32, i32) {
    %c0_i32 = arith.constant 0 : i32
    %c0_i32_0 = arith.constant 0 : i32
    return %arg0, %c0_i32 : i32, i32
  }
  func.func @transform_2(%arg0: i32) -> (i32, i32) {
    %c0_i32 = arith.constant 0 : i32
    %c0_i32_0 = arith.constant 0 : i32
    return %arg0, %c0_i32 : i32, i32
  }
}

</mosaic_0001>

<llo_original>
// kernel: tpu_custom_call.1
$region0: #{tpu_custom_call.1}
  #allocation0 [shape = 'u32[]', space=smem, size = 0x4, offset = 0x4, fixed_abs, tag = 'smem constant byte address 0x4 - core index']
  #allocation1 [shape = 'u32[144,128]{1,0:T(1,128)}', space=vmem, size = 0x12000, scoped, tag = 'internal scratch']
  %s0 = inlined_call_operand.hbm [shape: f32[16,32], index: 0, kind: input, shape index: {}]
  %s1 = inlined_call_operand.hbm [shape: f32[16,32], index: 1, kind: input, shape index: {}]
  %s2 = inlined_call_operand.vmem [shape: f32[16,1], index: 2, kind: output, shape index: {}]
  %s3 = sld [smem:[#allocation0]]
  $region26: #{tpu_custom_call.1} parent=0
    _
  %s5 = ssub.s32 1, %s3
  %s6 = scalar_select 0, %s5, %s3
  $region1: #{tpu_custom_call.1} parent=0
    #allocation2 [shape = 'u8[8192]{0}', space=vmem, size = 0x2000, scoped, tag = 'input window, operand 0, single buffered']
    #allocation3 [shape = 's32[1]{0}', space=sflag, size = 0x4, scoped, tag = 'scoped memory for tpu_custom_call.1']
    #allocation4 [shape = 'u8[8192]{0}', space=vmem, size = 0x2000, scoped, tag = 'input window, operand 1, single buffered']
    #allocation5 [shape = 's32[1]{0}', space=sflag, size = 0x4, scoped, tag = 'scoped memory for tpu_custom_call.1']
    %7 = vsyncpa [#allocation3], 0
    %8 = vsyncpa [#allocation5], 0
    // Predicated region
    $region2: #{tpu_custom_call.1} parent=1 // pred_check
      _
    $region3: #{tpu_custom_call.1} parent=1 // pred_check_branch
      %10 = sbr.rel (0) target = $region5
    $region4: #{tpu_custom_call.1} parent=1 // pred_region
      %s12 = ssub.s32 256, 256
      %13 = vsyncadd [#allocation3], %s12
      %s14 = sshll.u32 [#allocation2], 4
      %s15 = int_to_ptr.vmem [resolvable:$true] %s14
      %20 = dma.hbm_to_vmem [thread:$0]  %s0, 256, %s15, [#allocation3], 128, 128, 8
    $region5: #{tpu_custom_call.1} parent=1 // pred_fallthru
      _
    // Predicated region
    $region6: #{tpu_custom_call.1} parent=1 // pred_check
      _
    $region7: #{tpu_custom_call.1} parent=1 // pred_check_branch
      %22 = sbr.rel (0) target = $region9
    $region8: #{tpu_custom_call.1} parent=1 // pred_region
      %s24 = ssub.s32 256, 256
      %25 = vsyncadd [#allocation5], %s24
      %s26 = sshll.u32 [#allocation4], 4
      %s27 = int_to_ptr.vmem [resolvable:$true] %s26
      %32 = dma.hbm_to_vmem [thread:$0]  %s1, 256, %s27, [#allocation5], 128, 128, 8
    $region9: #{tpu_custom_call.1} parent=1 // pred_fallthru
      _
    // Predicated region
    $region10: #{tpu_custom_call.1} parent=1 // pred_check
      _
    $region11: #{tpu_custom_call.1} parent=1 // pred_check_branch
      %34 = sbr.rel (0) target = $region13
    $region12: #{tpu_custom_call.1} parent=1 // pred_region
      %35 = dma.done [#allocation3], 256
    $region13: #{tpu_custom_call.1} parent=1 // pred_fallthru
      _
    // Predicated region
    $region14: #{tpu_custom_call.1} parent=1 // pred_check
      _
    $region15: #{tpu_custom_call.1} parent=1 // pred_check_branch
      %37 = sbr.rel (0) target = $region17
    $region16: #{tpu_custom_call.1} parent=1 // pred_region
      %38 = dma.done [#allocation5], 256
    $region17: #{tpu_custom_call.1} parent=1 // pred_fallthru
      _
    %v39 = vld [vmem:[#allocation2] sm:$0xff]
    %v40 = vld [vmem:[#allocation2 + $0x8] sm:$0xff]
    %v41 = vld [vmem:[#allocation4] sm:$0xff]
    %v42 = vld [vmem:[#allocation4 + $0x8] sm:$0xff]
    %vm43 = vcmask 261120
    %v44 = vsel %vm43, %v39, -inf
    %45 = vmax.xlane.f32.xlu0 %v44
    %v46 = vpop.xlane.xlu0 %45
    %v47 = vsel %vm43, %v40, -inf
    %48 = vmax.xlane.f32.xlu0 %v47
    %v49 = vpop.xlane.xlu0 %48
    %v50 = vsub.f32 %v39, %v46
    %v51 = vsub.f32 %v40, %v49
    %v52 = vmul.f32 %v50, 1.442695
    %v53 = vpow.pop %v52
    %v54 = vmul.f32 %v51, 1.442695
    %v55 = vpow.pop %v54
    %v56 = vsel %vm43, %v53, 0.0
    %57 = vadd.xlane.f32.xlu0 %v56
    %v58 = vpop.xlane.xlu0 %57
    %v59 = vsel %vm43, %v55, 0.0
    %60 = vadd.xlane.f32.xlu0 %v59
    %v61 = vpop.xlane.xlu0 %60
    %v62 = vlog2.pop %v58
    %v63 = vmul.f32 %v62, 0.6931472
    %v64 = vlog2.pop %v61
    %v65 = vmul.f32 %v64, 0.6931472
    %v66 = vsel %vm43, %v41, 0.0
    %67 = vadd.xlane.f32.xlu0 %v66
    %v68 = vpop.xlane.xlu0 %67
    %v69 = vsel %vm43, %v42, 0.0
    %70 = vadd.xlane.f32.xlu0 %v69
    %v71 = vpop.xlane.xlu0 %70
    %v72 = vmul.f32 %v41, %v39
    %v73 = vmul.f32 %v42, %v40
    %v74 = vsel %vm43, %v72, 0.0
    %75 = vadd.xlane.f32.xlu0 %v74
    %v76 = vpop.xlane.xlu0 %75
    %v77 = vsel %vm43, %v73, 0.0
    %78 = vadd.xlane.f32.xlu0 %v77
    %v79 = vpop.xlane.xlu0 %78
    %v80 = vadd.f32 %v46, %v63
    %v81 = vadd.f32 %v49, %v65
    %v82 = vmul.f32 %v68, %v80
    %v83 = vmul.f32 %v71, %v81
    %v84 = vsub.f32 %v82, %v76
    %v85 = vsub.f32 %v83, %v79
    %vm86 = vcmask 7168
    %87 = vst.msk [vmem:[%s2] sm:$0xff] %vm86, %v84
    %88 = vst.msk [vmem:[%s2 + $0x8] sm:$0xff] %vm86, %v85
    // Predicated region
    $region18: #{tpu_custom_call.1} parent=1 // pred_check
      _
    $region19: #{tpu_custom_call.1} parent=1 // pred_check_branch
      %90 = sbr.rel (0) target = $region21
    $region20: #{tpu_custom_call.1} parent=1 // pred_region
      _
    $region21: #{tpu_custom_call.1} parent=1 // pred_fallthru
      _
    // Predicated region
    $region22: #{tpu_custom_call.1} parent=1 // pred_check
      _
    $region23: #{tpu_custom_call.1} parent=1 // pred_check_branch
      %92 = sbr.rel (0) target = $region25
    $region24: #{tpu_custom_call.1} parent=1 // pred_region
      _
    $region25: #{tpu_custom_call.1} parent=1 // pred_fallthru
      _
    %93 = vsyncpa [#allocation3], 1
    %94 = vsyncpa [#allocation5], 1

</llo_original>
